<compile_context>
chip_gen: v7x
topology: tpu7x:2x2x1
jax: 0.10.0
libtpu: 0.0.40
codegen_flags: <defaults>
</compile_context>

<pallas_src>
import functools

import jax
import jax.numpy as jnp
from jax.experimental import pallas as pl
from jax.experimental.pallas import tpu as pltpu


def _round_up(x, m):
    return ((x + m - 1) // m) * m


_TILE_CAP = 2048  # rows per grid step (sweep 512/1024/2048 if re-tuning)


def _choose_tile_b(B):
    """Batch-tile heuristic: big tiles (amortize per-step overhead), but keep
    >=4 grid steps for large batches so v7x's two TensorCores both get work."""
    if B < 512:
        return _round_up(max(B, 8), 8)        # single (possibly partial) tile
    tile = _round_up(pl.cdiv(B, 4), 8)
    return max(256, min(_TILE_CAP, tile))


def _retrieval_kernel(obs_dim,
                      obs_ref, act_ref, eps_ref,
                      w1o_ref, w1a_ref, b1_ref,
                      w2_ref, b2_ref,
                      w3_ref, b3_ref,
                      wh_ref, bh_ref,
                      out_ref):
    # ----- layer 1: split-K dot (obs part + act part), replaces cat([o, a]) -----
    h = (jnp.dot(obs_ref[...].astype(jnp.bfloat16), w1o_ref[...],
                 preferred_element_type=jnp.float32)
         + jnp.dot(act_ref[...].astype(jnp.bfloat16), w1a_ref[...],
                   preferred_element_type=jnp.float32)
         + b1_ref[...])
    h = jnp.maximum(h, 0.0)

    # ----- layer 2 -----
    h = jnp.dot(h.astype(jnp.bfloat16), w2_ref[...],
                preferred_element_type=jnp.float32) + b2_ref[...]
    h = jnp.maximum(h, 0.0)

    # ----- layer 3 -----
    h = jnp.dot(h.astype(jnp.bfloat16), w3_ref[...],
                preferred_element_type=jnp.float32) + b3_ref[...]
    h = jnp.maximum(h, 0.0)

    # ----- fused, lane-padded mu|logvar head -----
    # wh/bh are zero-padded to the full output-slab width, so `heads` already
    # has: lanes [0:obs_dim] == 0, [obs_dim:2od] == mu, [2od:3od] == logvar,
    # [3od:] == 0.  One full-width unmasked store writes it all.
    heads = jnp.dot(h.astype(jnp.bfloat16), wh_ref[...],
                    preferred_element_type=jnp.float32) + bh_ref[...]
    out_ref[...] = heads

    # reparameterization: next_obs = mu + eps * exp(0.5 * logvar)   (all f32)
    mu = heads[:, obs_dim:2 * obs_dim]
    logvar = heads[:, 2 * obs_dim:3 * obs_dim]
    next_obs = mu + eps_ref[...] * jnp.exp(0.5 * logvar)
    # single small masked store into the reserved first obs_dim lanes
    out_ref[:, :obs_dim] = next_obs


def pack_params(params, obs_dim):
    """Torch-style params -> kernel layout:
    bf16 weights, split w1, fused head zero-padded to the output slab width."""
    (w1, b1, w2, b2, w3, b3, wmu, bmu, wlv, blv) = params
    hidden = w2.shape[0]
    out_lanes = _round_up(3 * obs_dim, 128)

    w1o = w1[:obs_dim].astype(jnp.bfloat16)
    w1a = w1[obs_dim:].astype(jnp.bfloat16)

    # Head weight/bias padded so the head matmul writes directly into the
    # packed output layout [next_obs(0s) | mu | logvar | 0-pad].
    wh = jnp.zeros((hidden, out_lanes), jnp.float32)
    wh = wh.at[:, obs_dim:2 * obs_dim].set(wmu)
    wh = wh.at[:, 2 * obs_dim:3 * obs_dim].set(wlv)
    bh = jnp.zeros((1, out_lanes), jnp.float32)
    bh = bh.at[:, obs_dim:2 * obs_dim].set(bmu)
    bh = bh.at[:, 2 * obs_dim:3 * obs_dim].set(blv)

    return (w1o, w1a, b1.astype(jnp.float32),
            w2.astype(jnp.bfloat16), b2.astype(jnp.float32),
            w3.astype(jnp.bfloat16), b3.astype(jnp.float32),
            wh.astype(jnp.bfloat16), bh)


@jax.jit
def retrieval_forward(observations, actions, eps, packed_params):
    """observations: (B, obs_dim), actions: (B, act_dim), eps: (B, obs_dim)."""
    B, obs_dim = observations.shape
    act_dim = actions.shape[1]
    (w1o, w1a, b1, w2, b2, w3, b3, wh, bh) = packed_params
    hidden = b1.shape[1]
    out_lanes = wh.shape[1]

    tile_b = _choose_tile_b(B)
    grid = (pl.cdiv(B, tile_b),)        # partial tail block; no input padding

    def rows(i):        # activation / output blocks march over the batch
        return (i, 0)

    def fixed(i):       # weights: constant block index -> stay VMEM-resident
        return (0, 0)

    kernel = functools.partial(_retrieval_kernel, obs_dim)

    out = pl.pallas_call(
        kernel,
        out_shape=jax.ShapeDtypeStruct((B, out_lanes), jnp.float32),
        grid=grid,
        in_specs=[
            pl.BlockSpec((tile_b, obs_dim), rows),      # observations
            pl.BlockSpec((tile_b, act_dim), rows),      # actions
            pl.BlockSpec((tile_b, obs_dim), rows),      # eps
            pl.BlockSpec((obs_dim, hidden), fixed),     # w1_obs (bf16)
            pl.BlockSpec((act_dim, hidden), fixed),     # w1_act (bf16)
            pl.BlockSpec((1, hidden), fixed),           # b1
            pl.BlockSpec((hidden, hidden), fixed),      # w2 (bf16)
            pl.BlockSpec((1, hidden), fixed),           # b2
            pl.BlockSpec((hidden, hidden), fixed),      # w3 (bf16)
            pl.BlockSpec((1, hidden), fixed),           # b3
            pl.BlockSpec((hidden, out_lanes), fixed),   # fused padded head W (bf16)
            pl.BlockSpec((1, out_lanes), fixed),        # fused padded head b
        ],
        out_specs=pl.BlockSpec((tile_b, out_lanes), rows),
        compiler_params=pltpu.CompilerParams(
            dimension_semantics=("parallel",),
            vmem_limit_bytes=48 * 1024 * 1024),
    )(observations, actions, eps,
      w1o, w1a, b1, w2, b2, w3, b3, wh, bh)

    # Column slices of the packed slab (fused by XLA under the caller's jit).
    next_obs = out[:, :obs_dim]
    mu = out[:, obs_dim:2 * obs_dim]
    logvar = out[:, 2 * obs_dim:3 * obs_dim]
    return next_obs, mu, logvar


def init_params(key, obs_dim, action_dim, hidden=256):
    """Deterministic init mimicking nn.Linear default (U(-1/sqrt(fan_in), +))."""
    def linear(key, fan_in, fan_out):
        kw, kb = jax.random.split(key)
        bound = 1.0 / jnp.sqrt(fan_in)
        # stored transposed vs torch: (fan_in, fan_out) so kernel does x @ W
        w = jax.random.uniform(kw, (fan_in, fan_out), jnp.float32, -bound, bound)
        b = jax.random.uniform(kb, (1, fan_out), jnp.float32, -bound, bound)
        return w, b

    keys = jax.random.split(key, 5)
    w1, b1 = linear(keys[0], obs_dim + action_dim, hidden)
    w2, b2 = linear(keys[1], hidden, hidden)
    w3, b3 = linear(keys[2], hidden, hidden)
    wmu, bmu = linear(keys[3], hidden, obs_dim)
    wlv, blv = linear(keys[4], hidden, obs_dim)
    return (w1, b1, w2, b2, w3, b3, wmu, bmu, wlv, blv)


def reference_forward(observations, actions, eps, params):
    """Pure-JAX f32 reference for correctness check."""
    (w1, b1, w2, b2, w3, b3, wmu, bmu, wlv, blv) = params
    oa = jnp.concatenate([observations, actions], axis=-1)
    h = jax.nn.relu(oa @ w1 + b1)
    h = jax.nn.relu(h @ w2 + b2)
    h = jax.nn.relu(h @ w3 + b3)
    mu = h @ wmu + bmu
    logvar = h @ wlv + blv
    std = jnp.exp(0.5 * logvar)
    return mu + eps * std, mu, logvar


def _bf16_round_weights(params):
    """Round the weight matrices through bf16 (same quantization the kernel sees)."""
    (w1, b1, w2, b2, w3, b3, wmu, bmu, wlv, blv) = params
    r = lambda w: w.astype(jnp.bfloat16).astype(jnp.float32)
    return (r(w1), b1, r(w2), b2, r(w3), b3, r(wmu), bmu, r(wlv), blv)


if __name__ == "__main__":
    key = jax.random.PRNGKey(0)
    k_obs, k_act, k_eps, k_params = jax.random.split(key, 4)

    B, obs_dim, action_dim = 16, 32, 8

    observations = jax.random.normal(k_obs, (B, obs_dim), jnp.float32)
    actions = jax.random.normal(k_act, (B, action_dim), jnp.float32)
    # torch.randn_like(std) equivalent, generated host-side for reproducibility
    eps = jax.random.normal(k_eps, (B, obs_dim), jnp.float32)

    params = init_params(k_params, obs_dim, action_dim)
    packed = pack_params(params, obs_dim)

    next_obs, mu, logvar = retrieval_forward(observations, actions, eps, packed)
    jax.block_until_ready((next_obs, mu, logvar))

    # sanity check against a pure-JAX reference using the same bf16-rounded
    # weights (kernel does bf16 MXU matmuls with f32 accumulation, so a small
    # tolerance is expected vs strict f32 math).
    ref_params = _bf16_round_weights(params)
    ref_next, ref_mu, ref_lv = reference_forward(observations, actions, eps, ref_params)
    assert jnp.allclose(next_obs, ref_next, atol=2e-2, rtol=2e-2), (
        float(jnp.max(jnp.abs(next_obs - ref_next))))
    assert jnp.allclose(mu, ref_mu, atol=2e-2, rtol=2e-2), (
        float(jnp.max(jnp.abs(mu - ref_mu))))
    assert jnp.allclose(logvar, ref_lv, atol=2e-2, rtol=2e-2), (
        float(jnp.max(jnp.abs(logvar - ref_lv))))

    print("KERNEL_OK")
</pallas_src>

<mosaic_0001>
module attributes {stable_mosaic.version = 11 : i64} {
  func.func @_retrieval_kernel(%arg0: i32, %arg1: memref<16x32xf32, #tpu.memory_space<vmem>>, %arg2: memref<16x8xf32, #tpu.memory_space<vmem>>, %arg3: memref<16x32xf32, #tpu.memory_space<vmem>>, %arg4: memref<32x256xbf16, #tpu.memory_space<vmem>>, %arg5: memref<8x256xbf16, #tpu.memory_space<vmem>>, %arg6: memref<1x256xf32, #tpu.memory_space<vmem>>, %arg7: memref<256x256xbf16, #tpu.memory_space<vmem>>, %arg8: memref<1x256xf32, #tpu.memory_space<vmem>>, %arg9: memref<256x256xbf16, #tpu.memory_space<vmem>>, %arg10: memref<1x256xf32, #tpu.memory_space<vmem>>, %arg11: memref<256x128xbf16, #tpu.memory_space<vmem>>, %arg12: memref<1x128xf32, #tpu.memory_space<vmem>>, %arg13: memref<16x128xf32, #tpu.memory_space<vmem>>) attributes {dimension_semantics = [#tpu.dimension_semantics<parallel>], iteration_bounds = array<i64: 1>, scalar_prefetch = 0 : i64, scratch_operands = 0 : i64, tpu.core_type = #tpu.core_type<tc>, window_params = [{transform_indices = @transform_0, window_bounds = array<i64: 16, 32>}, {transform_indices = @transform_1, window_bounds = array<i64: 16, 8>}, {transform_indices = @transform_2, window_bounds = array<i64: 16, 32>}, {pipeline_mode = #tpu.pipeline_mode<synchronous>, transform_indices = @transform_3, window_bounds = array<i64: 32, 256>}, {pipeline_mode = #tpu.pipeline_mode<synchronous>, transform_indices = @transform_4, window_bounds = array<i64: 8, 256>}, {pipeline_mode = #tpu.pipeline_mode<synchronous>, transform_indices = @transform_5, window_bounds = array<i64: 1, 256>}, {pipeline_mode = #tpu.pipeline_mode<synchronous>, transform_indices = @transform_6, window_bounds = array<i64: 256, 256>}, {pipeline_mode = #tpu.pipeline_mode<synchronous>, transform_indices = @transform_7, window_bounds = array<i64: 1, 256>}, {pipeline_mode = #tpu.pipeline_mode<synchronous>, transform_indices = @transform_8, window_bounds = array<i64: 256, 256>}, {pipeline_mode = #tpu.pipeline_mode<synchronous>, transform_indices = @transform_9, window_bounds = array<i64: 1, 256>}, {pipeline_mode = #tpu.pipeline_mode<synchronous>, transform_indices = @transform_10, window_bounds = array<i64: 256, 128>}, {pipeline_mode = #tpu.pipeline_mode<synchronous>, transform_indices = @transform_11, window_bounds = array<i64: 1, 128>}, {transform_indices = @transform_12, window_bounds = array<i64: 16, 128>}]} {
    %c0 = arith.constant 0 : index
    %c0_0 = arith.constant 0 : index
    %0 = vector.load %arg1[%c0, %c0_0] : memref<16x32xf32, #tpu.memory_space<vmem>>, vector<16x32xf32>
    %1 = arith.truncf %0 : vector<16x32xf32> to vector<16x32xbf16>
    %c0_1 = arith.constant 0 : index
    %c0_2 = arith.constant 0 : index
    %2 = vector.load %arg4[%c0_1, %c0_2] : memref<32x256xbf16, #tpu.memory_space<vmem>>, vector<32x256xbf16>
    %cst = arith.constant dense<0.000000e+00> : vector<16x256xf32>
    %3 = tpu.matmul %1, %2, %cst {dimension_numbers = #tpu.dot_dimension_numbers<[1], [0], [0], [1], [0, 0, 1, 1], [], []>} : vector<16x32xbf16>, vector<32x256xbf16>, vector<16x256xf32> -> vector<16x256xf32>
    %c0_3 = arith.constant 0 : index
    %c0_4 = arith.constant 0 : index
    %4 = vector.load %arg2[%c0_3, %c0_4] : memref<16x8xf32, #tpu.memory_space<vmem>>, vector<16x8xf32>
    %5 = arith.truncf %4 : vector<16x8xf32> to vector<16x8xbf16>
    %c0_5 = arith.constant 0 : index
    %c0_6 = arith.constant 0 : index
    %6 = vector.load %arg5[%c0_5, %c0_6] : memref<8x256xbf16, #tpu.memory_space<vmem>>, vector<8x256xbf16>
    %cst_7 = arith.constant dense<0.000000e+00> : vector<16x256xf32>
    %7 = tpu.matmul %5, %6, %cst_7 {dimension_numbers = #tpu.dot_dimension_numbers<[1], [0], [0], [1], [0, 0, 1, 1], [], []>} : vector<16x8xbf16>, vector<8x256xbf16>, vector<16x256xf32> -> vector<16x256xf32>
    %8 = arith.addf %3, %7 : vector<16x256xf32>
    %c0_8 = arith.constant 0 : index
    %c0_9 = arith.constant 0 : index
    %9 = vector.load %arg6[%c0_8, %c0_9] : memref<1x256xf32, #tpu.memory_space<vmem>>, vector<1x256xf32>
    %10 = vector.broadcast %9 : vector<1x256xf32> to vector<16x256xf32>
    %11 = arith.addf %8, %10 : vector<16x256xf32>
    %cst_10 = arith.constant 0.000000e+00 : f32
    %12 = vector.broadcast %cst_10 : f32 to vector<16x256xf32>
    %13 = arith.maximumf %11, %12 : vector<16x256xf32>
    %14 = arith.truncf %13 : vector<16x256xf32> to vector<16x256xbf16>
    %c0_11 = arith.constant 0 : index
    %c0_12 = arith.constant 0 : index
    %15 = vector.load %arg7[%c0_11, %c0_12] : memref<256x256xbf16, #tpu.memory_space<vmem>>, vector<256x256xbf16>
    %cst_13 = arith.constant dense<0.000000e+00> : vector<16x256xf32>
    %16 = tpu.matmul %14, %15, %cst_13 {dimension_numbers = #tpu.dot_dimension_numbers<[1], [0], [0], [1], [0, 0, 1, 1], [], []>} : vector<16x256xbf16>, vector<256x256xbf16>, vector<16x256xf32> -> vector<16x256xf32>
    %c0_14 = arith.constant 0 : index
    %c0_15 = arith.constant 0 : index
    %17 = vector.load %arg8[%c0_14, %c0_15] : memref<1x256xf32, #tpu.memory_space<vmem>>, vector<1x256xf32>
    %18 = vector.broadcast %17 : vector<1x256xf32> to vector<16x256xf32>
    %19 = arith.addf %16, %18 : vector<16x256xf32>
    %cst_16 = arith.constant 0.000000e+00 : f32
    %20 = vector.broadcast %cst_16 : f32 to vector<16x256xf32>
    %21 = arith.maximumf %19, %20 : vector<16x256xf32>
    %22 = arith.truncf %21 : vector<16x256xf32> to vector<16x256xbf16>
    %c0_17 = arith.constant 0 : index
    %c0_18 = arith.constant 0 : index
    %23 = vector.load %arg9[%c0_17, %c0_18] : memref<256x256xbf16, #tpu.memory_space<vmem>>, vector<256x256xbf16>
    %cst_19 = arith.constant dense<0.000000e+00> : vector<16x256xf32>
    %24 = tpu.matmul %22, %23, %cst_19 {dimension_numbers = #tpu.dot_dimension_numbers<[1], [0], [0], [1], [0, 0, 1, 1], [], []>} : vector<16x256xbf16>, vector<256x256xbf16>, vector<16x256xf32> -> vector<16x256xf32>
    %c0_20 = arith.constant 0 : index
    %c0_21 = arith.constant 0 : index
    %25 = vector.load %arg10[%c0_20, %c0_21] : memref<1x256xf32, #tpu.memory_space<vmem>>, vector<1x256xf32>
    %26 = vector.broadcast %25 : vector<1x256xf32> to vector<16x256xf32>
    %27 = arith.addf %24, %26 : vector<16x256xf32>
    %cst_22 = arith.constant 0.000000e+00 : f32
    %28 = vector.broadcast %cst_22 : f32 to vector<16x256xf32>
    %29 = arith.maximumf %27, %28 : vector<16x256xf32>
    %30 = arith.truncf %29 : vector<16x256xf32> to vector<16x256xbf16>
    %c0_23 = arith.constant 0 : index
    %c0_24 = arith.constant 0 : index
    %31 = vector.load %arg11[%c0_23, %c0_24] : memref<256x128xbf16, #tpu.memory_space<vmem>>, vector<256x128xbf16>
    %cst_25 = arith.constant dense<0.000000e+00> : vector<16x128xf32>
    %32 = tpu.matmul %30, %31, %cst_25 {dimension_numbers = #tpu.dot_dimension_numbers<[1], [0], [0], [1], [0, 0, 1, 1], [], []>} : vector<16x256xbf16>, vector<256x128xbf16>, vector<16x128xf32> -> vector<16x128xf32>
    %c0_26 = arith.constant 0 : index
    %c0_27 = arith.constant 0 : index
    %33 = vector.load %arg12[%c0_26, %c0_27] : memref<1x128xf32, #tpu.memory_space<vmem>>, vector<1x128xf32>
    %34 = vector.broadcast %33 : vector<1x128xf32> to vector<16x128xf32>
    %35 = arith.addf %32, %34 : vector<16x128xf32>
    %c0_28 = arith.constant 0 : index
    %c0_29 = arith.constant 0 : index
    %36 = vector.load %arg13[%c0_28, %c0_29] : memref<16x128xf32, #tpu.memory_space<vmem>>, vector<16x128xf32>
    tpu.vector_store %arg13[%c0_28, %c0_29], %35 {strides = array<i32>} : memref<16x128xf32, #tpu.memory_space<vmem>>, vector<16x128xf32>,
    %37 = vector.extract_strided_slice %35 {offsets = [0, 32], sizes = [16, 32], strides = [1, 1]} : vector<16x128xf32> to vector<16x32xf32>
    %38 = vector.extract_strided_slice %35 {offsets = [0, 64], sizes = [16, 32], strides = [1, 1]} : vector<16x128xf32> to vector<16x32xf32>
    %c0_30 = arith.constant 0 : index
    %c0_31 = arith.constant 0 : index
    %39 = vector.load %arg3[%c0_30, %c0_31] : memref<16x32xf32, #tpu.memory_space<vmem>>, vector<16x32xf32>
    %cst_32 = arith.constant 5.000000e-01 : f32
    %40 = vector.broadcast %cst_32 : f32 to vector<16x32xf32>
    %41 = arith.mulf %40, %38 : vector<16x32xf32>
    %42 = math.exp %41 : vector<16x32xf32>
    %43 = arith.mulf %39, %42 : vector<16x32xf32>
    %44 = arith.addf %37, %43 : vector<16x32xf32>
    %c0_33 = arith.constant 0 : index
    %c0_34 = arith.constant 0 : index
    %45 = vector.load %arg13[%c0_33, %c0_34] : memref<16x128xf32, #tpu.memory_space<vmem>>, vector<16x32xf32>
    tpu.vector_store %arg13[%c0_33, %c0_34], %44 {strides = array<i32>} : memref<16x128xf32, #tpu.memory_space<vmem>>, vector<16x32xf32>,
    return
  }
  func.func @transform_0(%arg0: i32) -> (i32, i32) {
    %c0_i32 = arith.constant 0 : i32
    %c0_i32_0 = arith.constant 0 : i32
    return %arg0, %c0_i32 : i32, i32
  }
  func.func @transform_1(%arg0: i32) -> (i32, i32) {
    %c0_i32 = arith.constant 0 : i32
    %c0_i32_0 = arith.constant 0 : i32
    return %arg0, %c0_i32 : i32, i32
  }
  func.func @transform_2(%arg0: i32) -> (i32, i32) {
    %c0_i32 = arith.constant 0 : i32
    %c0_i32_0 = arith.constant 0 : i32
    return %arg0, %c0_i32 : i32, i32
  }
  func.func @transform_3(%arg0: i32) -> (i32, i32) {
    %c0_i32 = arith.constant 0 : i32
    %c0_i32_0 = arith.constant 0 : i32
    %c0_i32_1 = arith.constant 0 : i32
    return %c0_i32, %c0_i32_0 : i32, i32
  }
  func.func @transform_4(%arg0: i32) -> (i32, i32) {
    %c0_i32 = arith.constant 0 : i32
    %c0_i32_0 = arith.constant 0 : i32
    %c0_i32_1 = arith.constant 0 : i32
    return %c0_i32, %c0_i32_0 : i32, i32
  }
  func.func @transform_5(%arg0: i32) -> (i32, i32) {
    %c0_i32 = arith.constant 0 : i32
    %c0_i32_0 = arith.constant 0 : i32
    %c0_i32_1 = arith.constant 0 : i32
    return %c0_i32, %c0_i32_0 : i32, i32
  }
  func.func @transform_6(%arg0: i32) -> (i32, i32) {
    %c0_i32 = arith.constant 0 : i32
    %c0_i32_0 = arith.constant 0 : i32
    %c0_i32_1 = arith.constant 0 : i32
    return %c0_i32, %c0_i32_0 : i32, i32
  }
  func.func @transform_7(%arg0: i32) -> (i32, i32) {
    %c0_i32 = arith.constant 0 : i32
    %c0_i32_0 = arith.constant 0 : i32
    %c0_i32_1 = arith.constant 0 : i32
    return %c0_i32, %c0_i32_0 : i32, i32
  }
  func.func @transform_8(%arg0: i32) -> (i32, i32) {
    %c0_i32 = arith.constant 0 : i32
    %c0_i32_0 = arith.constant 0 : i32
    %c0_i32_1 = arith.constant 0 : i32
    return %c0_i32, %c0_i32_0 : i32, i32
  }
  func.func @transform_9(%arg0: i32) -> (i32, i32) {
    %c0_i32 = arith.constant 0 : i32
    %c0_i32_0 = arith.constant 0 : i32
    %c0_i32_1 = arith.constant 0 : i32
    return %c0_i32, %c0_i32_0 : i32, i32
  }
  func.func @transform_10(%arg0: i32) -> (i32, i32) {
    %c0_i32 = arith.constant 0 : i32
    %c0_i32_0 = arith.constant 0 : i32
    %c0_i32_1 = arith.constant 0 : i32
    return %c0_i32, %c0_i32_0 : i32, i32
  }
  func.func @transform_11(%arg0: i32) -> (i32, i32) {
    %c0_i32 = arith.constant 0 : i32
    %c0_i32_0 = arith.constant 0 : i32
    %c0_i32_1 = arith.constant 0 : i32
    return %c0_i32, %c0_i32_0 : i32, i32
  }
  func.func @transform_12(%arg0: i32) -> (i32, i32) {
    %c0_i32 = arith.constant 0 : i32
    %c0_i32_0 = arith.constant 0 : i32
    return %arg0, %c0_i32 : i32, i32
  }
}

</mosaic_0001>

<llo_original>
// kernel: retrieval_forward.1
$region0: #{retrieval_forward.1}
  #allocation0 [shape = 'u32[]', space=smem, size = 0x4, offset = 0x4, fixed_abs, tag = 'smem constant byte address 0x4 - core index']
  #allocation1 [shape = 'u32[144,128]{1,0:T(1,128)}', space=vmem, size = 0x12000, scoped, tag = 'internal scratch']
  %s0 = inlined_call_operand.hbm [shape: f32[16,32], index: 0, kind: input, shape index: {}]
  %s1 = inlined_call_operand.vmem [shape: f32[16,8], index: 1, kind: input, shape index: {}]
  %s2 = inlined_call_operand.hbm [shape: f32[16,32], index: 2, kind: input, shape index: {}]
  %s3 = inlined_call_operand.vmem [shape: bf16[32,256], index: 3, kind: input, shape index: {}]
  %s4 = inlined_call_operand.hbm [shape: bf16[8,256], index: 4, kind: input, shape index: {}]
  %s5 = inlined_call_operand.vmem [shape: f32[1,256], index: 5, kind: input, shape index: {}]
  %s6 = inlined_call_operand.hbm [shape: bf16[256,256], index: 6, kind: input, shape index: {}]
  %s7 = inlined_call_operand.vmem [shape: f32[1,256], index: 7, kind: input, shape index: {}]
  %s8 = inlined_call_operand.hbm [shape: bf16[256,256], index: 8, kind: input, shape index: {}]
  %s9 = inlined_call_operand.vmem [shape: f32[1,256], index: 9, kind: input, shape index: {}]
  %s10 = inlined_call_operand.hbm [shape: bf16[256,128], index: 10, kind: input, shape index: {}]
  %s11 = inlined_call_operand.vmem [shape: f32[1,128], index: 11, kind: input, shape index: {}]
  %s12 = inlined_call_operand.vmem [shape: f32[16,128], index: 12, kind: output, shape index: {}]
  %s13 = sld [smem:[#allocation0]]
  $region82: #{retrieval_forward.1} parent=0
    _
  %s15 = ssub.s32 1, %s13
  %s16 = scalar_select 0, %s15, %s13
  $region1: #{retrieval_forward.1} parent=0
    #allocation2 [shape = 'u8[8192]{0}', space=vmem, size = 0x2000, scoped, tag = 'input window, operand 0, single buffered']
    #allocation3 [shape = 's32[1]{0}', space=sflag, size = 0x4, scoped, tag = 'scoped memory for retrieval_forward.1']
    #allocation4 [shape = 'u8[8192]{0}', space=vmem, size = 0x2000, scoped, tag = 'input window, operand 2, single buffered']
    #allocation5 [shape = 's32[1]{0}', space=sflag, size = 0x4, scoped, tag = 'scoped memory for retrieval_forward.1']
    #allocation6 [shape = 'u8[4096]{0}', space=vmem, size = 0x1000, scoped, tag = 'input window, operand 4, single buffered']
    #allocation7 [shape = 'u8[131072]{0}', space=vmem, size = 0x20000, scoped, tag = 'input window, operand 6, single buffered']
    #allocation8 [shape = 's32[1]{0}', space=sflag, size = 0x4, scoped, tag = 'scoped memory for retrieval_forward.1']
    #allocation9 [shape = 'u8[131072]{0}', space=vmem, size = 0x20000, scoped, tag = 'input window, operand 8, single buffered']
    #allocation10 [shape = 'u8[65536]{0}', space=vmem, size = 0x10000, scoped, tag = 'input window, operand 10, single buffered']
    #allocation11 [shape = 's32[1]{0}', space=sflag, size = 0x4, scoped, tag = 'scoped memory for retrieval_forward.1']
    %17 = vsyncpa [#allocation3], 0
    %18 = vsyncpa [#allocation5], 0
    %19 = vsyncpa [#allocation8], 0
    %20 = vsyncpa [#allocation11], 0
    // Predicated region
    $region2: #{retrieval_forward.1} parent=1 // pred_check
      _
    $region3: #{retrieval_forward.1} parent=1 // pred_check_branch
      %22 = sbr.rel (0) target = $region5
    $region4: #{retrieval_forward.1} parent=1 // pred_region
      %s24 = ssub.s32 256, 256
      %25 = vsyncadd [#allocation3], %s24
      %s26 = sshll.u32 [#allocation2], 4
      %s27 = int_to_ptr.vmem [resolvable:$true] %s26
      %32 = dma.hbm_to_vmem [thread:$0]  %s0, 256, %s27, [#allocation3], 128, 128, 8
    $region5: #{retrieval_forward.1} parent=1 // pred_fallthru
      _
    // Predicated region
    $region6: #{retrieval_forward.1} parent=1 // pred_check
      _
    $region7: #{retrieval_forward.1} parent=1 // pred_check_branch
      %34 = sbr.rel (0) target = $region9
    $region8: #{retrieval_forward.1} parent=1 // pred_region
      _
    $region9: #{retrieval_forward.1} parent=1 // pred_fallthru
      _
    // Predicated region
    $region10: #{retrieval_forward.1} parent=1 // pred_check
      _
    $region11: #{retrieval_forward.1} parent=1 // pred_check_branch
      %36 = sbr.rel (0) target = $region13
    $region12: #{retrieval_forward.1} parent=1 // pred_region
      %s38 = ssub.s32 256, 256
      %39 = vsyncadd [#allocation5], %s38
      %s40 = sshll.u32 [#allocation4], 4
      %s41 = int_to_ptr.vmem [resolvable:$true] %s40
      %46 = dma.hbm_to_vmem [thread:$0]  %s2, 256, %s41, [#allocation5], 128, 128, 8
    $region13: #{retrieval_forward.1} parent=1 // pred_fallthru
      _
    // Predicated region
    $region14: #{retrieval_forward.1} parent=1 // pred_check
      _
    $region15: #{retrieval_forward.1} parent=1 // pred_check_branch
      %48 = sbr.rel (0) target = $region17
    $region16: #{retrieval_forward.1} parent=1 // pred_region
      _
    $region17: #{retrieval_forward.1} parent=1 // pred_fallthru
      _
    // Predicated region
    $region18: #{retrieval_forward.1} parent=1 // pred_check
      _
    $region19: #{retrieval_forward.1} parent=1 // pred_check_branch
      %50 = sbr.rel (0) target = $region21
    $region20: #{retrieval_forward.1} parent=1 // pred_region
      %s52 = ssub.s32 128, 128
      %53 = vsyncadd [#allocation5], %s52
      %s55 = sshll.u32 [#allocation6], 4
      %s56 = int_to_ptr.vmem [resolvable:$true] %s55
      %58 = dma.hbm_to_vmem [thread:$0]  %s4, 128, %s56, [#allocation5]
    $region21: #{retrieval_forward.1} parent=1 // pred_fallthru
      _
    // Predicated region
    $region22: #{retrieval_forward.1} parent=1 // pred_check
      _
    $region23: #{retrieval_forward.1} parent=1 // pred_check_branch
      %60 = sbr.rel (0) target = $region25
    $region24: #{retrieval_forward.1} parent=1 // pred_region
      _
    $region25: #{retrieval_forward.1} parent=1 // pred_fallthru
      _
    // Predicated region
    $region26: #{retrieval_forward.1} parent=1 // pred_check
      _
    $region27: #{retrieval_forward.1} parent=1 // pred_check_branch
      %62 = sbr.rel (0) target = $region29
    $region28: #{retrieval_forward.1} parent=1 // pred_region
      %s64 = ssub.s32 4096, 4096
      %65 = vsyncadd [#allocation8], %s64
      %s66 = sshll.u32 [#allocation7], 4
      %s67 = int_to_ptr.vmem [resolvable:$true] %s66
      %72 = dma.hbm_to_vmem [thread:$0]  %s6, 4096, %s67, [#allocation8], 128, 128, 8
    $region29: #{retrieval_forward.1} parent=1 // pred_fallthru
      _
    // Predicated region
    $region30: #{retrieval_forward.1} parent=1 // pred_check
      _
    $region31: #{retrieval_forward.1} parent=1 // pred_check_branch
      %74 = sbr.rel (0) target = $region33
    $region32: #{retrieval_forward.1} parent=1 // pred_region
      _
    $region33: #{retrieval_forward.1} parent=1 // pred_fallthru
      _
    // Predicated region
    $region34: #{retrieval_forward.1} parent=1 // pred_check
      _
    $region35: #{retrieval_forward.1} parent=1 // pred_check_branch
      %76 = sbr.rel (0) target = $region37
    $region36: #{retrieval_forward.1} parent=1 // pred_region
      %s78 = ssub.s32 4096, 4096
      %79 = vsyncadd [#allocation8], %s78
      %s80 = sshll.u32 [#allocation9], 4
      %s81 = int_to_ptr.vmem [resolvable:$true] %s80
      %86 = dma.hbm_to_vmem [thread:$0]  %s8, 4096, %s81, [#allocation8], 128, 128, 8
    $region37: #{retrieval_forward.1} parent=1 // pred_fallthru
      _
    // Predicated region
    $region38: #{retrieval_forward.1} parent=1 // pred_check
      _
    $region39: #{retrieval_forward.1} parent=1 // pred_check_branch
      %88 = sbr.rel (0) target = $region41
    $region40: #{retrieval_forward.1} parent=1 // pred_region
      _
    $region41: #{retrieval_forward.1} parent=1 // pred_fallthru
      _
    // Predicated region
    $region42: #{retrieval_forward.1} parent=1 // pred_check
      _
    $region43: #{retrieval_forward.1} parent=1 // pred_check_branch
      %90 = sbr.rel (0) target = $region45
    $region44: #{retrieval_forward.1} parent=1 // pred_region
      %s92 = ssub.s32 2048, 2048
      %93 = vsyncadd [#allocation11], %s92
      %s94 = sshll.u32 [#allocation10], 4
      %s95 = int_to_ptr.vmem [resolvable:$true] %s94
      %100 = dma.hbm_to_vmem [thread:$0]  %s10, 2048, %s95, [#allocation11], 64, 64, 4
    $region45: #{retrieval_forward.1} parent=1 // pred_fallthru
      _
    // Predicated region
    $region46: #{retrieval_forward.1} parent=1 // pred_check
      _
    $region47: #{retrieval_forward.1} parent=1 // pred_check_branch
      %102 = sbr.rel (0) target = $region49
    $region48: #{retrieval_forward.1} parent=1 // pred_region
      _
    $region49: #{retrieval_forward.1} parent=1 // pred_fallthru
      _
    // Predicated region
    $region50: #{retrieval_forward.1} parent=1 // pred_check
      _
    $region51: #{retrieval_forward.1} parent=1 // pred_check_branch
      %104 = sbr.rel (0) target = $region53
    $region52: #{retrieval_forward.1} parent=1 // pred_region
      %105 = dma.done [#allocation3], 256
    $region53: #{retrieval_forward.1} parent=1 // pred_fallthru
      _
    // Predicated region
    $region54: #{retrieval_forward.1} parent=1 // pred_check
      _
    $region55: #{retrieval_forward.1} parent=1 // pred_check_branch
      %107 = sbr.rel (0) target = $region57
    $region56: #{retrieval_forward.1} parent=1 // pred_region
      %108 = dma.done [#allocation5], 256
    $region57: #{retrieval_forward.1} parent=1 // pred_fallthru
      _
    // Predicated region
    $region58: #{retrieval_forward.1} parent=1 // pred_check
      _
    $region59: #{retrieval_forward.1} parent=1 // pred_check_branch
      %110 = sbr.rel (0) target = $region61
    $region60: #{retrieval_forward.1} parent=1 // pred_region
      %111 = dma.done [#allocation5], 128
    $region61: #{retrieval_forward.1} parent=1 // pred_fallthru
      _
    // Predicated region
    $region62: #{retrieval_forward.1} parent=1 // pred_check
      _
    $region63: #{retrieval_forward.1} parent=1 // pred_check_branch
      %113 = sbr.rel (0) target = $region65
    $region64: #{retrieval_forward.1} parent=1 // pred_region
      %114 = dma.done [#allocation8], 4096
    $region65: #{retrieval_forward.1} parent=1 // pred_fallthru
      _
    // Predicated region
    $region66: #{retrieval_forward.1} parent=1 // pred_check
      _
    $region67: #{retrieval_forward.1} parent=1 // pred_check_branch
      %116 = sbr.rel (0) target = $region69
    $region68: #{retrieval_forward.1} parent=1 // pred_region
      %117 = dma.done [#allocation8], 4096
    $region69: #{retrieval_forward.1} parent=1 // pred_fallthru
      _
    // Predicated region
    $region70: #{retrieval_forward.1} parent=1 // pred_check
      _
    $region71: #{retrieval_forward.1} parent=1 // pred_check_branch
      %119 = sbr.rel (0) target = $region73
    $region72: #{retrieval_forward.1} parent=1 // pred_region
      %120 = dma.done [#allocation11], 2048
    $region73: #{retrieval_forward.1} parent=1 // pred_fallthru
      _
    %v122 = vld [vmem:[#allocation2] sm:$0xff]
    %v123 = vld [vmem:[#allocation2 + $0x8] sm:$0xff]
    %v124 = vpack.c.bf16 %v123, %v122
    %v125 = vld [vmem:[%s3] sm:$0xff]
    %v126 = vld [vmem:[%s3 + $0x8] sm:$0xff]
    %v127 = vld [vmem:[%s3 + $0x10] sm:$0xff]
    %v128 = vld [vmem:[%s3 + $0x18] sm:$0xff]
    %v129 = vld [vmem:[%s1] sm:$0xff]
    %v130 = vld [vmem:[%s1 + $0x8] sm:$0xff]
    %v131 = vpack.c.bf16 %v130, %v129
    %v132 = vld [vmem:[#allocation6] sm:$0xff]
    %v134 = vunpack.c.l.b16 %v132
    %v135 = vunpack.c.h.b16 %v132
    %v136 = vpack.c.b16 %v134, %v134
    %v137 = vpack.c.b16 %v135, %v135
    %vm138 = vcmask 64512
    %v140 = vsel %vm138, %v131, 0
    %vm142 = vcmask 1043456
    %v144 = vsel %vm142, %v136, 0
    %v147 = vsel %vm142, %v137, 0
    %149 = vmatprep.subr.bf16.mxu0 %v147
    %150 = vmatpush1.bf16.msra.mxu0 %v144
    %151 = vmatprep.subr.bf16.mxu0 0
    %152 = vmatpush1.bf16.msra.mxu0 0
    %153 = vmatprep.subr.bf16.mxu0 0
    %154 = vmatpush1.bf16.msra.mxu0 0
    %155 = vmatprep.subr.bf16.mxu0 0
    %156 = vmatpush1.bf16.msra.mxu0 0
    %157 = vmatprep.subr.bf16.mxu0 0
    %158 = vmatpush1.bf16.msra.mxu0 0
    %159 = vmatprep.subr.bf16.mxu0 0
    %160 = vmatpush1.bf16.msra.mxu0 0
    %161 = vmatprep.subr.bf16.mxu0 0
    %162 = vmatpush1.bf16.msra.mxu0 0
    %163 = vmatprep.subr.bf16.mxu0 0
    %164 = vmatpush1.bf16.msra.mxu0 0
    %165 = vmatprep.subr.bf16.mxu0 0
    %166 = vmatpush1.bf16.msra.mxu0 0
    %167 = vmatprep.subr.bf16.mxu0 0
    %168 = vmatpush1.bf16.msra.mxu0 0
    %169 = vmatprep.subr.bf16.mxu0 0
    %170 = vmatpush1.bf16.msra.mxu0 0
    %171 = vmatprep.subr.bf16.mxu0 0
    %172 = vmatpush1.bf16.msra.mxu0 0
    %173 = vmatprep.subr.bf16.mxu0 0
    %174 = vmatpush1.bf16.msra.mxu0 0
    %175 = vmatprep.subr.bf16.mxu0 0
    %176 = vmatpush1.bf16.msra.mxu0 0
    %177 = vmatprep.subr.bf16.mxu0 0
    %178 = vmatpush1.bf16.msra.mxu0 0
    %179 = vmatprep.subr.bf16.mxu0 0
    %180 = vmatpush1.bf16.msra.mxu0 0
    %181 = vmatprep.mubr.bf16.mxu0 0
    %182 = vmatmul.mubr.bf16.gmra.mrb[0].mxu0 %v140
    %v183 = vpop.f32.mrb[0].mxu0
    %v184 = vadd.f32 0.0, %v183
    %v185 = vpop.f32.mrb[0].mxu0
    %v186 = vadd.f32 0.0, %v185
    %v187 = vpop.f32.mrb[0].mxu0
    %v188 = vadd.f32 0.0, %v187
    %v189 = vpop.f32.mrb[0].mxu0
    %v190 = vadd.f32 0.0, %v189
    %191 = vdwg.mxu0
    %v196 = vunpack.c.l.b16 %v125
    %v197 = vunpack.c.h.b16 %v125
    %v198 = vunpack.c.l.b16 %v126
    %v199 = vunpack.c.h.b16 %v126
    %v200 = vunpack.c.l.b16 %v127
    %v201 = vunpack.c.h.b16 %v127
    %v202 = vunpack.c.l.b16 %v128
    %v203 = vunpack.c.h.b16 %v128
    %v204 = vpack.c.b16 %v198, %v196
    %v205 = vpack.c.b16 %v199, %v197
    %v206 = vpack.c.b16 %v202, %v200
    %v207 = vpack.c.b16 %v203, %v201
    %vm212 = vcmask 261120
    %v214 = vsel %vm212, %v124, 0
    %216 = vmatprep.subr.bf16.mxu0 %v205
    %217 = vmatpush1.bf16.msra.mxu0 %v204
    %218 = vmatprep.subr.bf16.mxu0 %v207
    %219 = vmatpush1.bf16.msra.mxu0 %v206
    %220 = vmatprep.subr.bf16.mxu0 0
    %221 = vmatpush1.bf16.msra.mxu0 0
    %222 = vmatprep.subr.bf16.mxu0 0
    %223 = vmatpush1.bf16.msra.mxu0 0
    %224 = vmatprep.subr.bf16.mxu0 0
    %225 = vmatpush1.bf16.msra.mxu0 0
    %226 = vmatprep.subr.bf16.mxu0 0
    %227 = vmatpush1.bf16.msra.mxu0 0
    %228 = vmatprep.subr.bf16.mxu0 0
    %229 = vmatpush1.bf16.msra.mxu0 0
    %230 = vmatprep.subr.bf16.mxu0 0
    %231 = vmatpush1.bf16.msra.mxu0 0
    %232 = vmatprep.subr.bf16.mxu0 0
    %233 = vmatpush1.bf16.msra.mxu0 0
    %234 = vmatprep.subr.bf16.mxu0 0
    %235 = vmatpush1.bf16.msra.mxu0 0
    %236 = vmatprep.subr.bf16.mxu0 0
    %237 = vmatpush1.bf16.msra.mxu0 0
    %238 = vmatprep.subr.bf16.mxu0 0
    %239 = vmatpush1.bf16.msra.mxu0 0
    %240 = vmatprep.subr.bf16.mxu0 0
    %241 = vmatpush1.bf16.msra.mxu0 0
    %242 = vmatprep.subr.bf16.mxu0 0
    %243 = vmatpush1.bf16.msra.mxu0 0
    %244 = vmatprep.subr.bf16.mxu0 0
    %245 = vmatpush1.bf16.msra.mxu0 0
    %246 = vmatprep.subr.bf16.mxu0 0
    %247 = vmatpush1.bf16.msra.mxu0 0
    %248 = vmatprep.mubr.bf16.mxu0 0
    %249 = vmatmul.mubr.bf16.gmra.mrb[0].mxu0 %v214
    %v250 = vpop.f32.mrb[0].mxu0
    %v251 = vadd.f32 %v184, %v250
    %v252 = vpop.f32.mrb[0].mxu0
    %v253 = vadd.f32 %v186, %v252
    %v254 = vpop.f32.mrb[0].mxu0
    %v255 = vadd.f32 %v188, %v254
    %v256 = vpop.f32.mrb[0].mxu0
    %v257 = vadd.f32 %v190, %v256
    %258 = vdwg.mxu0
    %v259 = vld [vmem:[%s5] sm:$0x3]
    %v261 = vlaneseq
    %v262 = vshrl.u32 %v261, 7
    %v263 = vsub.s32 0, %v262
    %v264 = vrot.slane %v259, %v263
    %v265 = vlaneseq
    %v266 = vshrl.u32 %v265, 7
    %v267 = vsub.s32 1, %v266
    %v268 = vrot.slane %v259, %v267
    %v271 = vadd.f32 %v251, %v264
    %v272 = vadd.f32 %v253, %v268
    %v273 = vadd.f32 %v255, %v264
    %v274 = vadd.f32 %v257, %v268
    %v275 = vmax.f32 %v271, 0.0
    %v276 = vmax.f32 %v272, 0.0
    %v277 = vmax.f32 %v273, 0.0
    %v278 = vmax.f32 %v274, 0.0
    %v279 = vpack.c.bf16 %v277, %v275
    %v280 = vpack.c.bf16 %v278, %v276
    %v281 = vld [vmem:[#allocation7] sm:$0xff]
    %v282 = vld [vmem:[#allocation7 + $0x8] sm:$0xff]
    %v283 = vld [vmem:[#allocation7 + $0x10] sm:$0xff]
    %v284 = vld [vmem:[#allocation7 + $0x18] sm:$0xff]
    %v285 = vld [vmem:[#allocation7 + $0x20] sm:$0xff]
    %v286 = vld [vmem:[#allocation7 + $0x28] sm:$0xff]
    %v287 = vld [vmem:[#allocation7 + $0x30] sm:$0xff]
    %v288 = vld [vmem:[#allocation7 + $0x38] sm:$0xff]
    %v289 = vld [vmem:[#allocation7 + $0x40] sm:$0xff]
    %v290 = vld [vmem:[#allocation7 + $0x48] sm:$0xff]
    %v291 = vld [vmem:[#allocation7 + $0x50] sm:$0xff]
    %v292 = vld [vmem:[#allocation7 + $0x58] sm:$0xff]
    %v293 = vld [vmem:[#allocation7 + $0x60] sm:$0xff]
    %v294 = vld [vmem:[#allocation7 + $0x68] sm:$0xff]
    %v295 = vld [vmem:[#allocation7 + $0x70] sm:$0xff]
    %v296 = vld [vmem:[#allocation7 + $0x78] sm:$0xff]
    %v297 = vld [vmem:[#allocation7 + $0x80] sm:$0xff]
    %v298 = vld [vmem:[#allocation7 + $0x88] sm:$0xff]
    %v299 = vld [vmem:[#allocation7 + $0x90] sm:$0xff]
    %v300 = vld [vmem:[#allocation7 + $0x98] sm:$0xff]
    %v301 = vld [vmem:[#allocation7 + $0xa0] sm:$0xff]
    %v302 = vld [vmem:[#allocation7 + $0xa8] sm:$0xff]
    %v303 = vld [vmem:[#allocation7 + $0xb0] sm:$0xff]
    %v304 = vld [vmem:[#allocation7 + $0xb8] sm:$0xff]
    %v305 = vld [vmem:[#allocation7 + $0xc0] sm:$0xff]
    %v306 = vld [vmem:[#allocation7 + $0xc8] sm:$0xff]
    %v307 = vld [vmem:[#allocation7 + $0xd0] sm:$0xff]
    %v308 = vld [vmem:[#allocation7 + $0xd8] sm:$0xff]
    %v309 = vld [vmem:[#allocation7 + $0xe0] sm:$0xff]
    %v310 = vld [vmem:[#allocation7 + $0xe8] sm:$0xff]
    %v311 = vld [vmem:[#allocation7 + $0xf0] sm:$0xff]
    %v312 = vld [vmem:[#allocation7 + $0xf8] sm:$0xff]
    %v313 = vld [vmem:[%s7] sm:$0x3]
    %v315 = vlaneseq
    %v316 = vshrl.u32 %v315, 7
    %v317 = vsub.s32 0, %v316
    %v318 = vrot.slane %v313, %v317
    %v319 = vlaneseq
    %v320 = vshrl.u32 %v319, 7
    %v321 = vsub.s32 1, %v320
    %v322 = vrot.slane %v313, %v321
    %v357 = vunpack.c.l.b16 %v281
    %v358 = vunpack.c.h.b16 %v281
    %v359 = vunpack.c.l.b16 %v282
    %v360 = vunpack.c.h.b16 %v282
    %v361 = vunpack.c.l.b16 %v283
    %v362 = vunpack.c.h.b16 %v283
    %v363 = vunpack.c.l.b16 %v284
    %v364 = vunpack.c.h.b16 %v284
    %v365 = vunpack.c.l.b16 %v285
    %v366 = vunpack.c.h.b16 %v285
    %v367 = vunpack.c.l.b16 %v286
    %v368 = vunpack.c.h.b16 %v286
    %v369 = vunpack.c.l.b16 %v287
    %v370 = vunpack.c.h.b16 %v287
    %v371 = vunpack.c.l.b16 %v288
    %v372 = vunpack.c.h.b16 %v288
    %v373 = vunpack.c.l.b16 %v289
    %v374 = vunpack.c.h.b16 %v289
    %v375 = vunpack.c.l.b16 %v290
    %v376 = vunpack.c.h.b16 %v290
    %v377 = vunpack.c.l.b16 %v291
    %v378 = vunpack.c.h.b16 %v291
    %v379 = vunpack.c.l.b16 %v292
    %v380 = vunpack.c.h.b16 %v292
    %v381 = vunpack.c.l.b16 %v293
    %v382 = vunpack.c.h.b16 %v293
    %v383 = vunpack.c.l.b16 %v294
    %v384 = vunpack.c.h.b16 %v294
    %v385 = vunpack.c.l.b16 %v295
    %v386 = vunpack.c.h.b16 %v295
    %v387 = vunpack.c.l.b16 %v296
    %v388 = vunpack.c.h.b16 %v296
    %v389 = vunpack.c.l.b16 %v297
    %v390 = vunpack.c.h.b16 %v297
    %v391 = vunpack.c.l.b16 %v298
    %v392 = vunpack.c.h.b16 %v298
    %v393 = vunpack.c.l.b16 %v299
    %v394 = vunpack.c.h.b16 %v299
    %v395 = vunpack.c.l.b16 %v300
    %v396 = vunpack.c.h.b16 %v300
    %v397 = vunpack.c.l.b16 %v301
    %v398 = vunpack.c.h.b16 %v301
    %v399 = vunpack.c.l.b16 %v302
    %v400 = vunpack.c.h.b16 %v302
    %v401 = vunpack.c.l.b16 %v303
    %v402 = vunpack.c.h.b16 %v303
    %v403 = vunpack.c.l.b16 %v304
    %v404 = vunpack.c.h.b16 %v304
    %v405 = vunpack.c.l.b16 %v305
    %v406 = vunpack.c.h.b16 %v305
    %v407 = vunpack.c.l.b16 %v306
    %v408 = vunpack.c.h.b16 %v306
    %v409 = vunpack.c.l.b16 %v307
    %v410 = vunpack.c.h.b16 %v307
    %v411 = vunpack.c.l.b16 %v308
    %v412 = vunpack.c.h.b16 %v308
    %v413 = vunpack.c.l.b16 %v309
    %v414 = vunpack.c.h.b16 %v309
    %v415 = vunpack.c.l.b16 %v310
    %v416 = vunpack.c.h.b16 %v310
    %v417 = vunpack.c.l.b16 %v311
    %v418 = vunpack.c.h.b16 %v311
    %v419 = vunpack.c.l.b16 %v312
    %v420 = vunpack.c.h.b16 %v312
    %v421 = vpack.c.b16 %v359, %v357
    %v422 = vpack.c.b16 %v360, %v358
    %v423 = vpack.c.b16 %v363, %v361
    %v424 = vpack.c.b16 %v364, %v362
    %v425 = vpack.c.b16 %v367, %v365
    %v426 = vpack.c.b16 %v368, %v366
    %v427 = vpack.c.b16 %v371, %v369
    %v428 = vpack.c.b16 %v372, %v370
    %v429 = vpack.c.b16 %v375, %v373
    %v430 = vpack.c.b16 %v376, %v374
    %v431 = vpack.c.b16 %v379, %v377
    %v432 = vpack.c.b16 %v380, %v378
    %v433 = vpack.c.b16 %v383, %v381
    %v434 = vpack.c.b16 %v384, %v382
    %v435 = vpack.c.b16 %v387, %v385
    %v436 = vpack.c.b16 %v388, %v386
    %v437 = vpack.c.b16 %v391, %v389
    %v438 = vpack.c.b16 %v392, %v390
    %v439 = vpack.c.b16 %v395, %v393
    %v440 = vpack.c.b16 %v396, %v394
    %v441 = vpack.c.b16 %v399, %v397
    %v442 = vpack.c.b16 %v400, %v398
    %v443 = vpack.c.b16 %v403, %v401
    %v444 = vpack.c.b16 %v404, %v402
    %v445 = vpack.c.b16 %v407, %v405
    %v446 = vpack.c.b16 %v408, %v406
    %v447 = vpack.c.b16 %v411, %v409
    %v448 = vpack.c.b16 %v412, %v410
    %v449 = vpack.c.b16 %v415, %v413
    %v450 = vpack.c.b16 %v416, %v414
    %v451 = vpack.c.b16 %v419, %v417
    %v452 = vpack.c.b16 %v420, %v418
    %485 = vmatprep.subr.bf16.mxu0 %v422
    %486 = vmatpush1.bf16.msra.mxu0 %v421
    %487 = vmatprep.subr.bf16.mxu0 %v424
    %488 = vmatpush1.bf16.msra.mxu0 %v423
    %489 = vmatprep.subr.bf16.mxu0 %v426
    %490 = vmatpush1.bf16.msra.mxu0 %v425
    %491 = vmatprep.subr.bf16.mxu0 %v428
    %492 = vmatpush1.bf16.msra.mxu0 %v427
    %493 = vmatprep.subr.bf16.mxu0 %v430
    %494 = vmatpush1.bf16.msra.mxu0 %v429
    %495 = vmatprep.subr.bf16.mxu0 %v432
    %496 = vmatpush1.bf16.msra.mxu0 %v431
    %497 = vmatprep.subr.bf16.mxu0 %v434
    %498 = vmatpush1.bf16.msra.mxu0 %v433
    %499 = vmatprep.subr.bf16.mxu0 %v436
    %500 = vmatpush1.bf16.msra.mxu0 %v435
    %501 = vmatprep.subr.bf16.mxu0 %v438
    %502 = vmatpush1.bf16.msra.mxu0 %v437
    %503 = vmatprep.subr.bf16.mxu0 %v440
    %504 = vmatpush1.bf16.msra.mxu0 %v439
    %505 = vmatprep.subr.bf16.mxu0 %v442
    %506 = vmatpush1.bf16.msra.mxu0 %v441
    %507 = vmatprep.subr.bf16.mxu0 %v444
    %508 = vmatpush1.bf16.msra.mxu0 %v443
    %509 = vmatprep.subr.bf16.mxu0 %v446
    %510 = vmatpush1.bf16.msra.mxu0 %v445
    %511 = vmatprep.subr.bf16.mxu0 %v448
    %512 = vmatpush1.bf16.msra.mxu0 %v447
    %513 = vmatprep.subr.bf16.mxu0 %v450
    %514 = vmatpush1.bf16.msra.mxu0 %v449
    %515 = vmatprep.subr.bf16.mxu0 %v452
    %516 = vmatpush1.bf16.msra.mxu0 %v451
    %517 = vmatprep.mubr.bf16.mxu0 %v280
    %518 = vmatmul.mubr.bf16.gmra.mrb[0].mxu0 %v279
    %v519 = vpop.f32.mrb[0].mxu0
    %v520 = vadd.f32 %v318, %v519
    %v521 = vpop.f32.mrb[0].mxu0
    %v522 = vadd.f32 %v322, %v521
    %v523 = vpop.f32.mrb[0].mxu0
    %v524 = vadd.f32 %v318, %v523
    %v525 = vpop.f32.mrb[0].mxu0
    %v526 = vadd.f32 %v322, %v525
    %527 = vdwg.mxu0
    %v528 = vmax.f32 %v520, 0.0
    %v529 = vmax.f32 %v522, 0.0
    %v530 = vmax.f32 %v524, 0.0
    %v531 = vmax.f32 %v526, 0.0
    %v532 = vpack.c.bf16 %v530, %v528
    %v533 = vpack.c.bf16 %v531, %v529
    %v534 = vld [vmem:[#allocation9] sm:$0xff]
    %v535 = vld [vmem:[#allocation9 + $0x8] sm:$0xff]
    %v536 = vld [vmem:[#allocation9 + $0x10] sm:$0xff]
    %v537 = vld [vmem:[#allocation9 + $0x18] sm:$0xff]
    %v538 = vld [vmem:[#allocation9 + $0x20] sm:$0xff]
    %v539 = vld [vmem:[#allocation9 + $0x28] sm:$0xff]
    %v540 = vld [vmem:[#allocation9 + $0x30] sm:$0xff]
    %v541 = vld [vmem:[#allocation9 + $0x38] sm:$0xff]
    %v542 = vld [vmem:[#allocation9 + $0x40] sm:$0xff]
    %v543 = vld [vmem:[#allocation9 + $0x48] sm:$0xff]
    %v544 = vld [vmem:[#allocation9 + $0x50] sm:$0xff]
    %v545 = vld [vmem:[#allocation9 + $0x58] sm:$0xff]
    %v546 = vld [vmem:[#allocation9 + $0x60] sm:$0xff]
    %v547 = vld [vmem:[#allocation9 + $0x68] sm:$0xff]
    %v548 = vld [vmem:[#allocation9 + $0x70] sm:$0xff]
    %v549 = vld [vmem:[#allocation9 + $0x78] sm:$0xff]
    %v550 = vld [vmem:[#allocation9 + $0x80] sm:$0xff]
    %v551 = vld [vmem:[#allocation9 + $0x88] sm:$0xff]
    %v552 = vld [vmem:[#allocation9 + $0x90] sm:$0xff]
    %v553 = vld [vmem:[#allocation9 + $0x98] sm:$0xff]
    %v554 = vld [vmem:[#allocation9 + $0xa0] sm:$0xff]
    %v555 = vld [vmem:[#allocation9 + $0xa8] sm:$0xff]
    %v556 = vld [vmem:[#allocation9 + $0xb0] sm:$0xff]
    %v557 = vld [vmem:[#allocation9 + $0xb8] sm:$0xff]
    %v558 = vld [vmem:[#allocation9 + $0xc0] sm:$0xff]
    %v559 = vld [vmem:[#allocation9 + $0xc8] sm:$0xff]
    %v560 = vld [vmem:[#allocation9 + $0xd0] sm:$0xff]
    %v561 = vld [vmem:[#allocation9 + $0xd8] sm:$0xff]
    %v562 = vld [vmem:[#allocation9 + $0xe0] sm:$0xff]
    %v563 = vld [vmem:[#allocation9 + $0xe8] sm:$0xff]
    %v564 = vld [vmem:[#allocation9 + $0xf0] sm:$0xff]
    %v565 = vld [vmem:[#allocation9 + $0xf8] sm:$0xff]
    %v566 = vld [vmem:[%s9] sm:$0x3]
    %v568 = vlaneseq
    %v569 = vshrl.u32 %v568, 7
    %v570 = vsub.s32 0, %v569
    %v571 = vrot.slane %v566, %v570
    %v572 = vlaneseq
    %v573 = vshrl.u32 %v572, 7
    %v574 = vsub.s32 1, %v573
    %v575 = vrot.slane %v566, %v574
    %v610 = vunpack.c.l.b16 %v534
    %v611 = vunpack.c.h.b16 %v534
    %v612 = vunpack.c.l.b16 %v535
    %v613 = vunpack.c.h.b16 %v535
    %v614 = vunpack.c.l.b16 %v536
    %v615 = vunpack.c.h.b16 %v536
    %v616 = vunpack.c.l.b16 %v537
    %v617 = vunpack.c.h.b16 %v537
    %v618 = vunpack.c.l.b16 %v538
    %v619 = vunpack.c.h.b16 %v538
    %v620 = vunpack.c.l.b16 %v539
    %v621 = vunpack.c.h.b16 %v539
    %v622 = vunpack.c.l.b16 %v540
    %v623 = vunpack.c.h.b16 %v540
    %v624 = vunpack.c.l.b16 %v541
    %v625 = vunpack.c.h.b16 %v541
    %v626 = vunpack.c.l.b16 %v542
    %v627 = vunpack.c.h.b16 %v542
    %v628 = vunpack.c.l.b16 %v543
    %v629 = vunpack.c.h.b16 %v543
    %v630 = vunpack.c.l.b16 %v544
    %v631 = vunpack.c.h.b16 %v544
    %v632 = vunpack.c.l.b16 %v545
    %v633 = vunpack.c.h.b16 %v545
    %v634 = vunpack.c.l.b16 %v546
    %v635 = vunpack.c.h.b16 %v546
    %v636 = vunpack.c.l.b16 %v547
    %v637 = vunpack.c.h.b16 %v547
    %v638 = vunpack.c.l.b16 %v548
    %v639 = vunpack.c.h.b16 %v548
    %v640 = vunpack.c.l.b16 %v549
    %v641 = vunpack.c.h.b16 %v549
    %v642 = vunpack.c.l.b16 %v550
    %v643 = vunpack.c.h.b16 %v550
    %v644 = vunpack.c.l.b16 %v551
    %v645 = vunpack.c.h.b16 %v551
    %v646 = vunpack.c.l.b16 %v552
    %v647 = vunpack.c.h.b16 %v552
    %v648 = vunpack.c.l.b16 %v553
    %v649 = vunpack.c.h.b16 %v553
    %v650 = vunpack.c.l.b16 %v554
    %v651 = vunpack.c.h.b16 %v554
    %v652 = vunpack.c.l.b16 %v555
    %v653 = vunpack.c.h.b16 %v555
    %v654 = vunpack.c.l.b16 %v556
    %v655 = vunpack.c.h.b16 %v556
    %v656 = vunpack.c.l.b16 %v557
    %v657 = vunpack.c.h.b16 %v557
    %v658 = vunpack.c.l.b16 %v558
    %v659 = vunpack.c.h.b16 %v558
    %v660 = vunpack.c.l.b16 %v559
    %v661 = vunpack.c.h.b16 %v559
    %v662 = vunpack.c.l.b16 %v560
    %v663 = vunpack.c.h.b16 %v560
    %v664 = vunpack.c.l.b16 %v561
    %v665 = vunpack.c.h.b16 %v561
    %v666 = vunpack.c.l.b16 %v562
    %v667 = vunpack.c.h.b16 %v562
    %v668 = vunpack.c.l.b16 %v563
    %v669 = vunpack.c.h.b16 %v563
    %v670 = vunpack.c.l.b16 %v564
    %v671 = vunpack.c.h.b16 %v564
    %v672 = vunpack.c.l.b16 %v565
    %v673 = vunpack.c.h.b16 %v565
    %v674 = vpack.c.b16 %v612, %v610
    %v675 = vpack.c.b16 %v613, %v611
    %v676 = vpack.c.b16 %v616, %v614
    %v677 = vpack.c.b16 %v617, %v615
    %v678 = vpack.c.b16 %v620, %v618
    %v679 = vpack.c.b16 %v621, %v619
    %v680 = vpack.c.b16 %v624, %v622
    %v681 = vpack.c.b16 %v625, %v623
    %v682 = vpack.c.b16 %v628, %v626
    %v683 = vpack.c.b16 %v629, %v627
    %v684 = vpack.c.b16 %v632, %v630
    %v685 = vpack.c.b16 %v633, %v631
    %v686 = vpack.c.b16 %v636, %v634
    %v687 = vpack.c.b16 %v637, %v635
    %v688 = vpack.c.b16 %v640, %v638
    %v689 = vpack.c.b16 %v641, %v639
    %v690 = vpack.c.b16 %v644, %v642
    %v691 = vpack.c.b16 %v645, %v643
    %v692 = vpack.c.b16 %v648, %v646
    %v693 = vpack.c.b16 %v649, %v647
    %v694 = vpack.c.b16 %v652, %v650
    %v695 = vpack.c.b16 %v653, %v651
    %v696 = vpack.c.b16 %v656, %v654
    %v697 = vpack.c.b16 %v657, %v655
    %v698 = vpack.c.b16 %v660, %v658
    %v699 = vpack.c.b16 %v661, %v659
    %v700 = vpack.c.b16 %v664, %v662
    %v701 = vpack.c.b16 %v665, %v663
    %v702 = vpack.c.b16 %v668, %v666
    %v703 = vpack.c.b16 %v669, %v667
    %v704 = vpack.c.b16 %v672, %v670
    %v705 = vpack.c.b16 %v673, %v671
    %738 = vmatprep.subr.bf16.mxu0 %v675
    %739 = vmatpush1.bf16.msra.mxu0 %v674
    %740 = vmatprep.subr.bf16.mxu0 %v677
    %741 = vmatpush1.bf16.msra.mxu0 %v676
    %742 = vmatprep.subr.bf16.mxu0 %v679
    %743 = vmatpush1.bf16.msra.mxu0 %v678
    %744 = vmatprep.subr.bf16.mxu0 %v681
    %745 = vmatpush1.bf16.msra.mxu0 %v680
    %746 = vmatprep.subr.bf16.mxu0 %v683
    %747 = vmatpush1.bf16.msra.mxu0 %v682
    %748 = vmatprep.subr.bf16.mxu0 %v685
    %749 = vmatpush1.bf16.msra.mxu0 %v684
    %750 = vmatprep.subr.bf16.mxu0 %v687
    %751 = vmatpush1.bf16.msra.mxu0 %v686
    %752 = vmatprep.subr.bf16.mxu0 %v689
    %753 = vmatpush1.bf16.msra.mxu0 %v688
    %754 = vmatprep.subr.bf16.mxu0 %v691
    %755 = vmatpush1.bf16.msra.mxu0 %v690
    %756 = vmatprep.subr.bf16.mxu0 %v693
    %757 = vmatpush1.bf16.msra.mxu0 %v692
    %758 = vmatprep.subr.bf16.mxu0 %v695
    %759 = vmatpush1.bf16.msra.mxu0 %v694
    %760 = vmatprep.subr.bf16.mxu0 %v697
    %761 = vmatpush1.bf16.msra.mxu0 %v696
    %762 = vmatprep.subr.bf16.mxu0 %v699
    %763 = vmatpush1.bf16.msra.mxu0 %v698
    %764 = vmatprep.subr.bf16.mxu0 %v701
    %765 = vmatpush1.bf16.msra.mxu0 %v700
    %766 = vmatprep.subr.bf16.mxu0 %v703
    %767 = vmatpush1.bf16.msra.mxu0 %v702
    %768 = vmatprep.subr.bf16.mxu0 %v705
    %769 = vmatpush1.bf16.msra.mxu0 %v704
    %770 = vmatprep.mubr.bf16.mxu0 %v533
    %771 = vmatmul.mubr.bf16.gmra.mrb[0].mxu0 %v532
    %v772 = vpop.f32.mrb[0].mxu0
    %v773 = vadd.f32 %v571, %v772
    %v774 = vpop.f32.mrb[0].mxu0
    %v775 = vadd.f32 %v575, %v774
    %v776 = vpop.f32.mrb[0].mxu0
    %v777 = vadd.f32 %v571, %v776
    %v778 = vpop.f32.mrb[0].mxu0
    %v779 = vadd.f32 %v575, %v778
    %780 = vdwg.mxu0
    %v781 = vmax.f32 %v773, 0.0
    %v782 = vmax.f32 %v775, 0.0
    %v783 = vmax.f32 %v777, 0.0
    %v784 = vmax.f32 %v779, 0.0
    %v785 = vpack.c.bf16 %v783, %v781
    %v786 = vpack.c.bf16 %v784, %v782
    %v787 = vld [vmem:[#allocation10] sm:$0xf]
    %v788 = vld [vmem:[#allocation10 + $0x4] sm:$0xf]
    %v789 = vld [vmem:[#allocation10 + $0x8] sm:$0xf]
    %v790 = vld [vmem:[#allocation10 + $0xc] sm:$0xf]
    %v791 = vld [vmem:[#allocation10 + $0x10] sm:$0xf]
    %v792 = vld [vmem:[#allocation10 + $0x14] sm:$0xf]
    %v793 = vld [vmem:[#allocation10 + $0x18] sm:$0xf]
    %v794 = vld [vmem:[#allocation10 + $0x1c] sm:$0xf]
    %v795 = vld [vmem:[#allocation10 + $0x20] sm:$0xf]
    %v796 = vld [vmem:[#allocation10 + $0x24] sm:$0xf]
    %v797 = vld [vmem:[#allocation10 + $0x28] sm:$0xf]
    %v798 = vld [vmem:[#allocation10 + $0x2c] sm:$0xf]
    %v799 = vld [vmem:[#allocation10 + $0x30] sm:$0xf]
    %v800 = vld [vmem:[#allocation10 + $0x34] sm:$0xf]
    %v801 = vld [vmem:[#allocation10 + $0x38] sm:$0xf]
    %v802 = vld [vmem:[#allocation10 + $0x3c] sm:$0xf]
    %v803 = vld [vmem:[#allocation10 + $0x40] sm:$0xf]
    %v804 = vld [vmem:[#allocation10 + $0x44] sm:$0xf]
    %v805 = vld [vmem:[#allocation10 + $0x48] sm:$0xf]
    %v806 = vld [vmem:[#allocation10 + $0x4c] sm:$0xf]
    %v807 = vld [vmem:[#allocation10 + $0x50] sm:$0xf]
    %v808 = vld [vmem:[#allocation10 + $0x54] sm:$0xf]
    %v809 = vld [vmem:[#allocation10 + $0x58] sm:$0xf]
    %v810 = vld [vmem:[#allocation10 + $0x5c] sm:$0xf]
    %v811 = vld [vmem:[#allocation10 + $0x60] sm:$0xf]
    %v812 = vld [vmem:[#allocation10 + $0x64] sm:$0xf]
    %v813 = vld [vmem:[#allocation10 + $0x68] sm:$0xf]
    %v814 = vld [vmem:[#allocation10 + $0x6c] sm:$0xf]
    %v815 = vld [vmem:[#allocation10 + $0x70] sm:$0xf]
    %v816 = vld [vmem:[#allocation10 + $0x74] sm:$0xf]
    %v817 = vld [vmem:[#allocation10 + $0x78] sm:$0xf]
    %v818 = vld [vmem:[#allocation10 + $0x7c] sm:$0xf]
    %v819 = vld [vmem:[%s11] sm:$0x1]
    %v821 = vlaneseq
    %v822 = vshrl.u32 %v821, 7
    %v823 = vsub.s32 0, %v822
    %v824 = vrot.slane %v819, %v823
    %v858 = vunpack.c.l.b16 %v787
    %v859 = vunpack.c.l.b16 %v788
    %v860 = vunpack.c.l.b16 %v789
    %v861 = vunpack.c.l.b16 %v790
    %v862 = vunpack.c.l.b16 %v791
    %v863 = vunpack.c.l.b16 %v792
    %v864 = vunpack.c.l.b16 %v793
    %v865 = vunpack.c.l.b16 %v794
    %v866 = vunpack.c.l.b16 %v795
    %v867 = vunpack.c.l.b16 %v796
    %v868 = vunpack.c.l.b16 %v797
    %v869 = vunpack.c.l.b16 %v798
    %v870 = vunpack.c.l.b16 %v799
    %v871 = vunpack.c.l.b16 %v800
    %v872 = vunpack.c.l.b16 %v801
    %v873 = vunpack.c.l.b16 %v802
    %v874 = vunpack.c.l.b16 %v803
    %v875 = vunpack.c.l.b16 %v804
    %v876 = vunpack.c.l.b16 %v805
    %v877 = vunpack.c.l.b16 %v806
    %v878 = vunpack.c.l.b16 %v807
    %v879 = vunpack.c.l.b16 %v808
    %v880 = vunpack.c.l.b16 %v809
    %v881 = vunpack.c.l.b16 %v810
    %v882 = vunpack.c.l.b16 %v811
    %v883 = vunpack.c.l.b16 %v812
    %v884 = vunpack.c.l.b16 %v813
    %v885 = vunpack.c.l.b16 %v814
    %v886 = vunpack.c.l.b16 %v815
    %v887 = vunpack.c.l.b16 %v816
    %v888 = vunpack.c.l.b16 %v817
    %v889 = vunpack.c.l.b16 %v818
    %v890 = vpack.c.b16 %v859, %v858
    %v891 = vpack.c.b16 %v861, %v860
    %v892 = vpack.c.b16 %v863, %v862
    %v893 = vpack.c.b16 %v865, %v864
    %v894 = vpack.c.b16 %v867, %v866
    %v895 = vpack.c.b16 %v869, %v868
    %v896 = vpack.c.b16 %v871, %v870
    %v897 = vpack.c.b16 %v873, %v872
    %v898 = vpack.c.b16 %v875, %v874
    %v899 = vpack.c.b16 %v877, %v876
    %v900 = vpack.c.b16 %v879, %v878
    %v901 = vpack.c.b16 %v881, %v880
    %v902 = vpack.c.b16 %v883, %v882
    %v903 = vpack.c.b16 %v885, %v884
    %v904 = vpack.c.b16 %v887, %v886
    %v905 = vpack.c.b16 %v889, %v888
    %922 = vmatprep.subr.bf16.mxu0 0
    %923 = vmatpush1.bf16.msra.mxu0 %v890
    %924 = vmatprep.subr.bf16.mxu0 0
    %925 = vmatpush1.bf16.msra.mxu0 %v891
    %926 = vmatprep.subr.bf16.mxu0 0
    %927 = vmatpush1.bf16.msra.mxu0 %v892
    %928 = vmatprep.subr.bf16.mxu0 0
    %929 = vmatpush1.bf16.msra.mxu0 %v893
    %930 = vmatprep.subr.bf16.mxu0 0
    %931 = vmatpush1.bf16.msra.mxu0 %v894
    %932 = vmatprep.subr.bf16.mxu0 0
    %933 = vmatpush1.bf16.msra.mxu0 %v895
    %934 = vmatprep.subr.bf16.mxu0 0
    %935 = vmatpush1.bf16.msra.mxu0 %v896
    %936 = vmatprep.subr.bf16.mxu0 0
    %937 = vmatpush1.bf16.msra.mxu0 %v897
    %938 = vmatprep.subr.bf16.mxu0 0
    %939 = vmatpush1.bf16.msra.mxu0 %v898
    %940 = vmatprep.subr.bf16.mxu0 0
    %941 = vmatpush1.bf16.msra.mxu0 %v899
    %942 = vmatprep.subr.bf16.mxu0 0
    %943 = vmatpush1.bf16.msra.mxu0 %v900
    %944 = vmatprep.subr.bf16.mxu0 0
    %945 = vmatpush1.bf16.msra.mxu0 %v901
    %946 = vmatprep.subr.bf16.mxu0 0
    %947 = vmatpush1.bf16.msra.mxu0 %v902
    %948 = vmatprep.subr.bf16.mxu0 0
    %949 = vmatpush1.bf16.msra.mxu0 %v903
    %950 = vmatprep.subr.bf16.mxu0 0
    %951 = vmatpush1.bf16.msra.mxu0 %v904
    %952 = vmatprep.subr.bf16.mxu0 0
    %953 = vmatpush1.bf16.msra.mxu0 %v905
    %954 = vmatprep.mubr.bf16.mxu0 %v786
    %955 = vmatmul.mubr.bf16.gmra.mrb[0].mxu0 %v785
    %v956 = vpop.f32.mrb[0].mxu0
    %v957 = vadd.f32 %v824, %v956
    %v958 = vpop.f32.mrb[0].mxu0
    %v959 = vpop.f32.mrb[0].mxu0
    %v960 = vadd.f32 %v824, %v959
    %v961 = vpop.f32.mrb[0].mxu0
    %962 = vdwg.mxu0
    %963 = vst [vmem:[%s12] sm:$0xff] %v957
    %964 = vst [vmem:[%s12 + $0x8] sm:$0xff] %v960
    %v965 = vld [vmem:[#allocation4] sm:$0xff]
    %v966 = vld [vmem:[#allocation4 + $0x8] sm:$0xff]
    %v967 = vmul.f32 %v957, 0.5
    %v968 = vmul.f32 %v960, 0.5
    %v969 = vmul.f32 %v967, 1.442695
    %v970 = vpow.pop %v969
    %v971 = vmul.f32 %v968, 1.442695
    %v972 = vpow.pop %v971
    %975 = vrot.lane.b32.xlu0 %v970, 64
    %v976 = vpop.permute.xlu0 %975
    %977 = vrot.lane.b32.xlu0 %v972, 64
    %v978 = vpop.permute.xlu0 %977
    %v981 = vmul.f32 %v965, %v976
    %v982 = vmul.f32 %v966, %v978
    %985 = vrot.lane.b32.xlu0 %v981, 32
    %v986 = vpop.permute.xlu0 %985
    %987 = vrot.lane.b32.xlu0 %v982, 32
    %v988 = vpop.permute.xlu0 %987
    %v991 = vadd.f32 %v957, %v986
    %v992 = vadd.f32 %v960, %v988
    %995 = vrot.lane.b32.xlu0 %v991, 96
    %v996 = vpop.permute.xlu0 %995
    %997 = vrot.lane.b32.xlu0 %v992, 96
    %v998 = vpop.permute.xlu0 %997
    %1001 = vst.msk [vmem:[%s12] sm:$0xff] %vm212, %v996
    %1002 = vst.msk [vmem:[%s12 + $0x8] sm:$0xff] %vm212, %v998
    // Predicated region
    $region74: #{retrieval_forward.1} parent=1 // pred_check
      _
    $region75: #{retrieval_forward.1} parent=1 // pred_check_branch
      %1004 = sbr.rel (0) target = $region77
    $region76: #{retrieval_forward.1} parent=1 // pred_region
      _
    $region77: #{retrieval_forward.1} parent=1 // pred_fallthru
      _
    // Predicated region
    $region78: #{retrieval_forward.1} parent=1 // pred_check
      _
    $region79: #{retrieval_forward.1} parent=1 // pred_check_branch
      %1006 = sbr.rel (0) target = $region81
    $region80: #{retrieval_forward.1} parent=1 // pred_region
      _
    $region81: #{retrieval_forward.1} parent=1 // pred_fallthru
      _
    %1007 = vsyncpa [#allocation3], 1
    %1008 = vsyncpa [#allocation5], 1
    %1009 = vsyncpa [#allocation8], 1
    %1010 = vsyncpa [#allocation11], 1

</llo_original>
